<compile_context>
chip_gen: v5e
topology: v5e:2x2
jax: 0.10.0
libtpu: 0.0.40
codegen_flags: <defaults>
</compile_context>

<pallas_src>
import functools

import jax
import jax.numpy as jnp
from jax import lax
from jax.experimental import pallas as pl
from jax.experimental.pallas import tpu as pltpu


# --------------------------------------------------------------------------
# Pallas kernel: 3x3 conv (as 9 shifted matmuls) + bias [+ shortcut] [+ relu]
# --------------------------------------------------------------------------
def _conv3x3_kernel(x_ref, w_ref, b_ref, *rest, stride, tr, wo, hph,
                    relu, shortcut):
    """Computes one (batch, row-tile) block of:
         out = relu?( conv3x3(x) * bn_scale + bn_bias  [+ shortcut] )
       where bn_scale is pre-folded into w and the shortcut is either an
       identity add or a 1x1 projection matmul + bias.
    """
    if shortcut == "project":
        xsc_ref, wsc_ref, bsc_ref, o_ref = rest
    elif shortcut == "identity":
        xsc_ref, o_ref = rest
    else:
        (o_ref,) = rest

    s = stride
    row0 = pl.multiple_of(pl.program_id(1) * tr, tr)

    acc = None
    for dy in range(3):
        for dx in range(3):
            ph = (dy % s) * s + (dx % s)          # which stride-phase sub-image
            oy, ox = dy // s, dx // s             # unit-stride shift inside it
            xs = x_ref[0, pl.ds(ph * hph + oy + row0, tr), pl.ds(ox, wo), :]
            xs = xs.reshape(tr * wo, xs.shape[-1])
            t = jnp.dot(xs, w_ref[dy * 3 + dx],
                        preferred_element_type=jnp.float32)
            acc = t if acc is None else acc + t

    out = acc + b_ref[...]                        # f32 epilogue

    if shortcut == "project":
        out = out + jnp.dot(xsc_ref[0], wsc_ref[...],
                            preferred_element_type=jnp.float32) + bsc_ref[...]
    elif shortcut == "identity":
        out = out + xsc_ref[0].astype(jnp.float32)

    if relu:
        out = jnp.maximum(out, 0.0)
    o_ref[0] = out.astype(o_ref.dtype)


# --------------------------------------------------------------------------
# pallas_call wrapper
# --------------------------------------------------------------------------
def _round_up(x, m):
    return (x + m - 1) // m * m


def _pick_row_tile(ho, wo, max_pixels=2048):
    """Row-tile so that tr*wo pixels per step is bounded (VMEM / pipelining)."""
    if ho * wo <= max_pixels:
        return ho
    for t in range(ho, 0, -1):
        if ho % t == 0 and t * wo <= max_pixels and (t * wo) % 8 == 0:
            return t
    return ho


def _conv3x3_block(xph, w9, bias, *, stride, ho, wo, hph, relu,
                   shortcut=None, xsc=None, wsc=None, bsc=None, out_dtype):
    n = xph.shape[0]
    cp = w9.shape[-1]
    tr = _pick_row_tile(ho, wo)
    p = tr * wo

    in_specs = [
        # full (phase-stacked, padded) activation slab per batch; resident
        # across the row-tile axis (same block index -> no re-DMA).
        pl.BlockSpec((1,) + xph.shape[1:], lambda b, r: (b, 0, 0, 0)),
        pl.BlockSpec(w9.shape, lambda b, r: (0, 0, 0)),
        pl.BlockSpec(bias.shape, lambda b, r: (0, 0)),
    ]
    args = [xph, w9, bias]
    if shortcut == "project":
        in_specs += [
            pl.BlockSpec((1, p, xsc.shape[-1]), lambda b, r: (b, r, 0)),
            pl.BlockSpec(wsc.shape, lambda b, r: (0, 0)),
            pl.BlockSpec(bsc.shape, lambda b, r: (0, 0)),
        ]
        args += [xsc, wsc, bsc]
    elif shortcut == "identity":
        in_specs += [pl.BlockSpec((1, p, xsc.shape[-1]), lambda b, r: (b, r, 0))]
        args += [xsc]

    kernel = functools.partial(_conv3x3_kernel, stride=stride, tr=tr, wo=wo,
                               hph=hph, relu=relu, shortcut=shortcut)
    return pl.pallas_call(
        kernel,
        out_shape=jax.ShapeDtypeStruct((n, ho * wo, cp), out_dtype),
        grid_spec=pltpu.PrefetchScalarGridSpec(
            num_scalar_prefetch=0,
            grid=(n, ho // tr),
            in_specs=in_specs,
            out_specs=pl.BlockSpec((1, p, cp), lambda b, r: (b, r, 0)),
        ),
        compiler_params=pltpu.CompilerParams(
            dimension_semantics=("parallel", "parallel")),
    )(*args)


# --------------------------------------------------------------------------
# Plain-JAX glue
# --------------------------------------------------------------------------
def _make_phases(x_nhwc, stride):
    """Zero-pad (pad=1 conv) and split into stride*stride phase sub-images so
    the kernel only needs unit-stride shifted slices.  Returns an array of
    shape (N, stride*stride*Hph, Wph, C) plus (Ho, Wo, Hph)."""
    n, h, w, c = x_nhwc.shape
    s = stride
    ho = (h - 1) // s + 1
    wo = (w - 1) // s + 1
    q = -(-2 // s)                      # ceil(2/s): halo rows/cols per phase
    hph, wph = ho + q, wo + q
    xp = jnp.pad(x_nhwc, ((0, 0), (1, s), (1, s), (0, 0)))
    phases = []
    for py in range(s):
        for px in range(s):
            phases.append(xp[:, py: py + s * (hph - 1) + 1: s,
                              px: px + s * (wph - 1) + 1: s, :])
    xph = jnp.concatenate(phases, axis=1) if len(phases) > 1 else phases[0]
    return xph, ho, wo, hph


def _bn_fold(gamma, beta, mean, var, eps=1e-5):
    scale = gamma / jnp.sqrt(var + eps)
    return scale, beta - mean * scale


# --------------------------------------------------------------------------
# Parameter init (deterministic, synthetic)
# --------------------------------------------------------------------------
def init_basic_block_params(key, in_planes, planes, stride):
    ks = jax.random.split(key, 10)

    def conv_init(k, shape, fan_in):
        return jax.random.normal(k, shape, jnp.float32) / jnp.sqrt(float(fan_in))

    def bn_init(k, c):
        kg, kb, km, kv = jax.random.split(k, 4)
        gamma = 1.0 + 0.1 * jax.random.normal(kg, (c,), jnp.float32)
        beta = 0.1 * jax.random.normal(kb, (c,), jnp.float32)
        mean = 0.05 * jax.random.normal(km, (c,), jnp.float32)
        var = 1.0 + 0.1 * jax.random.uniform(kv, (c,), jnp.float32)
        return (gamma, beta, mean, var)

    params = {
        "w1": conv_init(ks[0], (3, 3, in_planes, planes), 9 * in_planes),  # HWIO
        "bn1": bn_init(ks[1], planes),
        "w2": conv_init(ks[2], (3, 3, planes, planes), 9 * planes),        # HWIO
        "bn2": bn_init(ks[3], planes),
    }
    if stride != 1 or in_planes != planes:
        params["wsc"] = conv_init(ks[4], (in_planes, planes), in_planes)   # 1x1 (IO)
        params["bnsc"] = bn_init(ks[5], planes)
    return params


# --------------------------------------------------------------------------
# BasicBlock forward (Pallas)
# --------------------------------------------------------------------------
def basic_block_forward(params, x_nchw, *, stride, skip_relu=False,
                        compute_dtype=jnp.float32):
    x = jnp.transpose(x_nchw, (0, 2, 3, 1)).astype(jnp.float32)   # NCHW -> NHWC
    n, h, w, cin = x.shape
    planes = params["w1"].shape[-1]
    cp = _round_up(planes, 128)          # lane-dense output channels
    pad_c = cp - planes

    # ---- conv1 + bn1 + relu -------------------------------------------------
    s1, b1 = _bn_fold(*params["bn1"])
    w1 = params["w1"] * s1                                   # fold BN scale
    w1 = jnp.pad(w1, ((0, 0), (0, 0), (0, 0), (0, pad_c)))
    w1 = w1.reshape(9, cin, cp).astype(compute_dtype)
    b1 = jnp.pad(b1, (0, pad_c)).reshape(1, cp).astype(jnp.float32)

    xph1, ho, wo, hph1 = _make_phases(x.astype(compute_dtype), stride)
    h1 = _conv3x3_block(xph1, w1, b1, stride=stride, ho=ho, wo=wo, hph=hph1,
                        relu=True, out_dtype=compute_dtype)   # (n, ho*wo, cp)

    # ---- conv2 + bn2 + shortcut (+ relu) -------------------------------------
    s2, b2 = _bn_fold(*params["bn2"])
    w2 = params["w2"] * s2
    w2 = jnp.pad(w2, ((0, 0), (0, 0), (0, pad_c), (0, pad_c)))
    w2 = w2.reshape(9, cp, cp).astype(compute_dtype)
    b2 = jnp.pad(b2, (0, pad_c)).reshape(1, cp).astype(jnp.float32)

    xph2, _, _, hph2 = _make_phases(h1.reshape(n, ho, wo, cp), 1)

    if stride != 1 or cin != planes:
        ssc, bsc = _bn_fold(*params["bnsc"])
        wsc = jnp.pad(params["wsc"] * ssc, ((0, 0), (0, pad_c)))
        wsc = wsc.astype(compute_dtype)
        bsc = jnp.pad(bsc, (0, pad_c)).reshape(1, cp).astype(jnp.float32)
        xsc = x[:, ::stride, ::stride, :].reshape(n, ho * wo, cin)
        xsc = xsc.astype(compute_dtype)
        out = _conv3x3_block(xph2, w2, b2, stride=1, ho=ho, wo=wo, hph=hph2,
                             relu=not skip_relu, shortcut="project",
                             xsc=xsc, wsc=wsc, bsc=bsc, out_dtype=compute_dtype)
    else:
        # identity shortcut: plain VPU add inside the kernel (no matmul)
        xsc = jnp.pad(x, ((0, 0), (0, 0), (0, 0), (0, pad_c)))
        xsc = xsc.reshape(n, ho * wo, cp).astype(compute_dtype)
        out = _conv3x3_block(xph2, w2, b2, stride=1, ho=ho, wo=wo, hph=hph2,
                             relu=not skip_relu, shortcut="identity",
                             xsc=xsc, out_dtype=compute_dtype)

    out = out[:, :, :planes].astype(x_nchw.dtype).reshape(n, ho, wo, planes)
    return jnp.transpose(out, (0, 3, 1, 2))                   # NHWC -> NCHW


# --------------------------------------------------------------------------
# Pure-JAX reference (for correctness check only)
# --------------------------------------------------------------------------
def reference_forward(params, x_nchw, *, stride, skip_relu=False, eps=1e-5):
    x = jnp.transpose(x_nchw, (0, 2, 3, 1))
    dn = ("NHWC", "HWIO", "NHWC")

    def bn(y, p):
        g, b, m, v = p
        return (y - m) / jnp.sqrt(v + eps) * g + b

    h = lax.conv_general_dilated(x, params["w1"], (stride, stride),
                                 ((1, 1), (1, 1)), dimension_numbers=dn)
    h = jnp.maximum(bn(h, params["bn1"]), 0.0)
    o = lax.conv_general_dilated(h, params["w2"], (1, 1),
                                 ((1, 1), (1, 1)), dimension_numbers=dn)
    o = bn(o, params["bn2"])
    if stride != 1 or x.shape[-1] != params["w1"].shape[-1]:
        sc = lax.conv_general_dilated(x, params["wsc"][None, None],
                                      (stride, stride), "VALID",
                                      dimension_numbers=dn)
        sc = bn(sc, params["bnsc"])
    else:
        sc = x
    o = o + sc
    if not skip_relu:
        o = jnp.maximum(o, 0.0)
    return jnp.transpose(o, (0, 3, 1, 2))


# --------------------------------------------------------------------------
if __name__ == "__main__":
    key = jax.random.PRNGKey(0)
    kx, kp, kx2, kp2 = jax.random.split(key, 4)

    # Config 1: projection shortcut (stride=2, channel expansion 4 -> 8).
    n, in_planes, planes, h, w, stride = 2, 4, 8, 16, 16, 2
    x = jax.random.normal(kx, (n, in_planes, h, w), jnp.float32)
    params = init_basic_block_params(kp, in_planes, planes, stride)

    out = jax.block_until_ready(basic_block_forward(params, x, stride=stride))
    assert out.shape == (n, planes, h // stride, w // stride), out.shape
    ref = reference_forward(params, x, stride=stride)
    assert jnp.allclose(out, ref, atol=1e-4, rtol=1e-4), (
        float(jnp.max(jnp.abs(out - ref))))

    # bf16 MXU-operand variant (f32 accumulation / epilogue), looser tolerance.
    out_bf16 = jax.block_until_ready(
        basic_block_forward(params, x, stride=stride,
                            compute_dtype=jnp.bfloat16))
    assert jnp.allclose(out_bf16, ref, atol=1e-1, rtol=1e-1), (
        float(jnp.max(jnp.abs(out_bf16 - ref))))

    # Config 2: identity shortcut (stride=1, in_planes == planes).
    n2, planes2, h2 = 2, 8, 8
    x2 = jax.random.normal(kx2, (n2, planes2, h2, h2), jnp.float32)
    params2 = init_basic_block_params(kp2, planes2, planes2, 1)
    out2 = jax.block_until_ready(basic_block_forward(params2, x2, stride=1))
    ref2 = reference_forward(params2, x2, stride=1)
    assert jnp.allclose(out2, ref2, atol=1e-4, rtol=1e-4), (
        float(jnp.max(jnp.abs(out2 - ref2))))

    print("KERNEL_OK")
</pallas_src>

<mosaic_0001>
module attributes {stable_mosaic.version = 11 : i64} {
  func.func @_conv3x3_kernel(%arg0: i32, %arg1: i32, %arg2: memref<1x36x9x4xf32, #tpu.memory_space<vmem>>, %arg3: memref<9x4x128xf32, #tpu.memory_space<vmem>>, %arg4: memref<1x128xf32, #tpu.memory_space<vmem>>, %arg5: memref<1x64x128xf32, #tpu.memory_space<vmem>>) attributes {dimension_semantics = [#tpu.dimension_semantics<parallel>, #tpu.dimension_semantics<parallel>], iteration_bounds = array<i64: 2, 1>, scalar_prefetch = 0 : i64, scratch_operands = 0 : i64, tpu.core_type = #tpu.core_type<tc>, window_params = [{transform_indices = @transform_0, window_bounds = array<i64: 1, 36, 9, 4>}, {pipeline_mode = #tpu.pipeline_mode<synchronous>, transform_indices = @transform_1, window_bounds = array<i64: 9, 4, 128>}, {pipeline_mode = #tpu.pipeline_mode<synchronous>, transform_indices = @transform_2, window_bounds = array<i64: 1, 128>}, {transform_indices = @transform_3, window_bounds = array<i64: 1, 64, 128>}]} {
    %c8_i32 = arith.constant 8 : i32
    %0 = arith.muli %arg1, %c8_i32 : i32
    %1 = tpu.assume_multiple %0, 8 : i32
    %c0_i32 = arith.constant 0 : i32
    %2 = arith.addi %c0_i32, %1 : i32
    %c0 = arith.constant 0 : index
    %3 = arith.index_cast %2 : i32 to index
    %c0_0 = arith.constant 0 : index
    %c0_1 = arith.constant 0 : index
    %4 = vector.load %arg2[%c0, %3, %c0_0, %c0_1] : memref<1x36x9x4xf32, #tpu.memory_space<vmem>>, vector<1x8x8x4xf32>
    %5 = vector.shape_cast %4 : vector<1x8x8x4xf32> to vector<8x8x4xf32>
    %6 = vector.shape_cast %5 : vector<8x8x4xf32> to vector<64x4xf32>
    %c0_2 = arith.constant 0 : index
    %c0_3 = arith.constant 0 : index
    %c0_4 = arith.constant 0 : index
    %7 = vector.load %arg3[%c0_2, %c0_3, %c0_4] : memref<9x4x128xf32, #tpu.memory_space<vmem>>, vector<1x4x128xf32>
    %8 = vector.shape_cast %7 : vector<1x4x128xf32> to vector<4x128xf32>
    %cst = arith.constant dense<0.000000e+00> : vector<64x128xf32>
    %9 = tpu.matmul %6, %8, %cst {dimension_numbers = #tpu.dot_dimension_numbers<[1], [0], [0], [1], [0, 0, 1, 1], [], []>} : vector<64x4xf32>, vector<4x128xf32>, vector<64x128xf32> -> vector<64x128xf32>
    %c9_i32 = arith.constant 9 : i32
    %10 = arith.addi %c9_i32, %1 : i32
    %c0_5 = arith.constant 0 : index
    %11 = arith.index_cast %10 : i32 to index
    %c0_6 = arith.constant 0 : index
    %c0_7 = arith.constant 0 : index
    %12 = vector.load %arg2[%c0_5, %11, %c0_6, %c0_7] : memref<1x36x9x4xf32, #tpu.memory_space<vmem>>, vector<1x8x8x4xf32>
    %13 = vector.shape_cast %12 : vector<1x8x8x4xf32> to vector<8x8x4xf32>
    %14 = vector.shape_cast %13 : vector<8x8x4xf32> to vector<64x4xf32>
    %c1 = arith.constant 1 : index
    %c0_8 = arith.constant 0 : index
    %c0_9 = arith.constant 0 : index
    %15 = vector.load %arg3[%c1, %c0_8, %c0_9] : memref<9x4x128xf32, #tpu.memory_space<vmem>>, vector<1x4x128xf32>
    %16 = vector.shape_cast %15 : vector<1x4x128xf32> to vector<4x128xf32>
    %cst_10 = arith.constant dense<0.000000e+00> : vector<64x128xf32>
    %17 = tpu.matmul %14, %16, %cst_10 {dimension_numbers = #tpu.dot_dimension_numbers<[1], [0], [0], [1], [0, 0, 1, 1], [], []>} : vector<64x4xf32>, vector<4x128xf32>, vector<64x128xf32> -> vector<64x128xf32>
    %18 = arith.addf %9, %17 : vector<64x128xf32>
    %c0_i32_11 = arith.constant 0 : i32
    %19 = arith.addi %c0_i32_11, %1 : i32
    %c0_12 = arith.constant 0 : index
    %20 = arith.index_cast %19 : i32 to index
    %c1_13 = arith.constant 1 : index
    %c0_14 = arith.constant 0 : index
    %21 = vector.load %arg2[%c0_12, %20, %c1_13, %c0_14] : memref<1x36x9x4xf32, #tpu.memory_space<vmem>>, vector<1x8x8x4xf32>
    %22 = vector.shape_cast %21 : vector<1x8x8x4xf32> to vector<8x8x4xf32>
    %23 = vector.shape_cast %22 : vector<8x8x4xf32> to vector<64x4xf32>
    %c2 = arith.constant 2 : index
    %c0_15 = arith.constant 0 : index
    %c0_16 = arith.constant 0 : index
    %24 = vector.load %arg3[%c2, %c0_15, %c0_16] : memref<9x4x128xf32, #tpu.memory_space<vmem>>, vector<1x4x128xf32>
    %25 = vector.shape_cast %24 : vector<1x4x128xf32> to vector<4x128xf32>
    %cst_17 = arith.constant dense<0.000000e+00> : vector<64x128xf32>
    %26 = tpu.matmul %23, %25, %cst_17 {dimension_numbers = #tpu.dot_dimension_numbers<[1], [0], [0], [1], [0, 0, 1, 1], [], []>} : vector<64x4xf32>, vector<4x128xf32>, vector<64x128xf32> -> vector<64x128xf32>
    %27 = arith.addf %18, %26 : vector<64x128xf32>
    %c18_i32 = arith.constant 18 : i32
    %28 = arith.addi %c18_i32, %1 : i32
    %c0_18 = arith.constant 0 : index
    %29 = arith.index_cast %28 : i32 to index
    %c0_19 = arith.constant 0 : index
    %c0_20 = arith.constant 0 : index
    %30 = vector.load %arg2[%c0_18, %29, %c0_19, %c0_20] : memref<1x36x9x4xf32, #tpu.memory_space<vmem>>, vector<1x8x8x4xf32>
    %31 = vector.shape_cast %30 : vector<1x8x8x4xf32> to vector<8x8x4xf32>
    %32 = vector.shape_cast %31 : vector<8x8x4xf32> to vector<64x4xf32>
    %c3 = arith.constant 3 : index
    %c0_21 = arith.constant 0 : index
    %c0_22 = arith.constant 0 : index
    %33 = vector.load %arg3[%c3, %c0_21, %c0_22] : memref<9x4x128xf32, #tpu.memory_space<vmem>>, vector<1x4x128xf32>
    %34 = vector.shape_cast %33 : vector<1x4x128xf32> to vector<4x128xf32>
    %cst_23 = arith.constant dense<0.000000e+00> : vector<64x128xf32>
    %35 = tpu.matmul %32, %34, %cst_23 {dimension_numbers = #tpu.dot_dimension_numbers<[1], [0], [0], [1], [0, 0, 1, 1], [], []>} : vector<64x4xf32>, vector<4x128xf32>, vector<64x128xf32> -> vector<64x128xf32>
    %36 = arith.addf %27, %35 : vector<64x128xf32>
    %c27_i32 = arith.constant 27 : i32
    %37 = arith.addi %c27_i32, %1 : i32
    %c0_24 = arith.constant 0 : index
    %38 = arith.index_cast %37 : i32 to index
    %c0_25 = arith.constant 0 : index
    %c0_26 = arith.constant 0 : index
    %39 = vector.load %arg2[%c0_24, %38, %c0_25, %c0_26] : memref<1x36x9x4xf32, #tpu.memory_space<vmem>>, vector<1x8x8x4xf32>
    %40 = vector.shape_cast %39 : vector<1x8x8x4xf32> to vector<8x8x4xf32>
    %41 = vector.shape_cast %40 : vector<8x8x4xf32> to vector<64x4xf32>
    %c4 = arith.constant 4 : index
    %c0_27 = arith.constant 0 : index
    %c0_28 = arith.constant 0 : index
    %42 = vector.load %arg3[%c4, %c0_27, %c0_28] : memref<9x4x128xf32, #tpu.memory_space<vmem>>, vector<1x4x128xf32>
    %43 = vector.shape_cast %42 : vector<1x4x128xf32> to vector<4x128xf32>
    %cst_29 = arith.constant dense<0.000000e+00> : vector<64x128xf32>
    %44 = tpu.matmul %41, %43, %cst_29 {dimension_numbers = #tpu.dot_dimension_numbers<[1], [0], [0], [1], [0, 0, 1, 1], [], []>} : vector<64x4xf32>, vector<4x128xf32>, vector<64x128xf32> -> vector<64x128xf32>
    %45 = arith.addf %36, %44 : vector<64x128xf32>
    %c18_i32_30 = arith.constant 18 : i32
    %46 = arith.addi %c18_i32_30, %1 : i32
    %c0_31 = arith.constant 0 : index
    %47 = arith.index_cast %46 : i32 to index
    %c1_32 = arith.constant 1 : index
    %c0_33 = arith.constant 0 : index
    %48 = vector.load %arg2[%c0_31, %47, %c1_32, %c0_33] : memref<1x36x9x4xf32, #tpu.memory_space<vmem>>, vector<1x8x8x4xf32>
    %49 = vector.shape_cast %48 : vector<1x8x8x4xf32> to vector<8x8x4xf32>
    %50 = vector.shape_cast %49 : vector<8x8x4xf32> to vector<64x4xf32>
    %c5 = arith.constant 5 : index
    %c0_34 = arith.constant 0 : index
    %c0_35 = arith.constant 0 : index
    %51 = vector.load %arg3[%c5, %c0_34, %c0_35] : memref<9x4x128xf32, #tpu.memory_space<vmem>>, vector<1x4x128xf32>
    %52 = vector.shape_cast %51 : vector<1x4x128xf32> to vector<4x128xf32>
    %cst_36 = arith.constant dense<0.000000e+00> : vector<64x128xf32>
    %53 = tpu.matmul %50, %52, %cst_36 {dimension_numbers = #tpu.dot_dimension_numbers<[1], [0], [0], [1], [0, 0, 1, 1], [], []>} : vector<64x4xf32>, vector<4x128xf32>, vector<64x128xf32> -> vector<64x128xf32>
    %54 = arith.addf %45, %53 : vector<64x128xf32>
    %c1_i32 = arith.constant 1 : i32
    %55 = arith.addi %c1_i32, %1 : i32
    %c0_37 = arith.constant 0 : index
    %56 = arith.index_cast %55 : i32 to index
    %c0_38 = arith.constant 0 : index
    %c0_39 = arith.constant 0 : index
    %57 = vector.load %arg2[%c0_37, %56, %c0_38, %c0_39] : memref<1x36x9x4xf32, #tpu.memory_space<vmem>>, vector<1x8x8x4xf32>
    %58 = vector.shape_cast %57 : vector<1x8x8x4xf32> to vector<8x8x4xf32>
    %59 = vector.shape_cast %58 : vector<8x8x4xf32> to vector<64x4xf32>
    %c6 = arith.constant 6 : index
    %c0_40 = arith.constant 0 : index
    %c0_41 = arith.constant 0 : index
    %60 = vector.load %arg3[%c6, %c0_40, %c0_41] : memref<9x4x128xf32, #tpu.memory_space<vmem>>, vector<1x4x128xf32>
    %61 = vector.shape_cast %60 : vector<1x4x128xf32> to vector<4x128xf32>
    %cst_42 = arith.constant dense<0.000000e+00> : vector<64x128xf32>
    %62 = tpu.matmul %59, %61, %cst_42 {dimension_numbers = #tpu.dot_dimension_numbers<[1], [0], [0], [1], [0, 0, 1, 1], [], []>} : vector<64x4xf32>, vector<4x128xf32>, vector<64x128xf32> -> vector<64x128xf32>
    %63 = arith.addf %54, %62 : vector<64x128xf32>
    %c10_i32 = arith.constant 10 : i32
    %64 = arith.addi %c10_i32, %1 : i32
    %c0_43 = arith.constant 0 : index
    %65 = arith.index_cast %64 : i32 to index
    %c0_44 = arith.constant 0 : index
    %c0_45 = arith.constant 0 : index
    %66 = vector.load %arg2[%c0_43, %65, %c0_44, %c0_45] : memref<1x36x9x4xf32, #tpu.memory_space<vmem>>, vector<1x8x8x4xf32>
    %67 = vector.shape_cast %66 : vector<1x8x8x4xf32> to vector<8x8x4xf32>
    %68 = vector.shape_cast %67 : vector<8x8x4xf32> to vector<64x4xf32>
    %c7 = arith.constant 7 : index
    %c0_46 = arith.constant 0 : index
    %c0_47 = arith.constant 0 : index
    %69 = vector.load %arg3[%c7, %c0_46, %c0_47] : memref<9x4x128xf32, #tpu.memory_space<vmem>>, vector<1x4x128xf32>
    %70 = vector.shape_cast %69 : vector<1x4x128xf32> to vector<4x128xf32>
    %cst_48 = arith.constant dense<0.000000e+00> : vector<64x128xf32>
    %71 = tpu.matmul %68, %70, %cst_48 {dimension_numbers = #tpu.dot_dimension_numbers<[1], [0], [0], [1], [0, 0, 1, 1], [], []>} : vector<64x4xf32>, vector<4x128xf32>, vector<64x128xf32> -> vector<64x128xf32>
    %72 = arith.addf %63, %71 : vector<64x128xf32>
    %c1_i32_49 = arith.constant 1 : i32
    %73 = arith.addi %c1_i32_49, %1 : i32
    %c0_50 = arith.constant 0 : index
    %74 = arith.index_cast %73 : i32 to index
    %c1_51 = arith.constant 1 : index
    %c0_52 = arith.constant 0 : index
    %75 = vector.load %arg2[%c0_50, %74, %c1_51, %c0_52] : memref<1x36x9x4xf32, #tpu.memory_space<vmem>>, vector<1x8x8x4xf32>
    %76 = vector.shape_cast %75 : vector<1x8x8x4xf32> to vector<8x8x4xf32>
    %77 = vector.shape_cast %76 : vector<8x8x4xf32> to vector<64x4xf32>
    %c8 = arith.constant 8 : index
    %c0_53 = arith.constant 0 : index
    %c0_54 = arith.constant 0 : index
    %78 = vector.load %arg3[%c8, %c0_53, %c0_54] : memref<9x4x128xf32, #tpu.memory_space<vmem>>, vector<1x4x128xf32>
    %79 = vector.shape_cast %78 : vector<1x4x128xf32> to vector<4x128xf32>
    %cst_55 = arith.constant dense<0.000000e+00> : vector<64x128xf32>
    %80 = tpu.matmul %77, %79, %cst_55 {dimension_numbers = #tpu.dot_dimension_numbers<[1], [0], [0], [1], [0, 0, 1, 1], [], []>} : vector<64x4xf32>, vector<4x128xf32>, vector<64x128xf32> -> vector<64x128xf32>
    %81 = arith.addf %72, %80 : vector<64x128xf32>
    %c0_56 = arith.constant 0 : index
    %c0_57 = arith.constant 0 : index
    %82 = vector.load %arg4[%c0_56, %c0_57] : memref<1x128xf32, #tpu.memory_space<vmem>>, vector<1x128xf32>
    %83 = vector.broadcast %82 : vector<1x128xf32> to vector<64x128xf32>
    %84 = arith.addf %81, %83 : vector<64x128xf32>
    %cst_58 = arith.constant 0.000000e+00 : f32
    %85 = vector.broadcast %cst_58 : f32 to vector<64x128xf32>
    %86 = arith.maximumf %84, %85 : vector<64x128xf32>
    %c0_59 = arith.constant 0 : index
    %c0_60 = arith.constant 0 : index
    %c0_61 = arith.constant 0 : index
    %87 = vector.load %arg5[%c0_59, %c0_60, %c0_61] : memref<1x64x128xf32, #tpu.memory_space<vmem>>, vector<1x64x128xf32>
    %88 = vector.shape_cast %87 : vector<1x64x128xf32> to vector<64x128xf32>
    %89 = vector.shape_cast %86 : vector<64x128xf32> to vector<1x64x128xf32>
    tpu.vector_store %arg5[%c0_59, %c0_60, %c0_61], %89 {strides = array<i32>} : memref<1x64x128xf32, #tpu.memory_space<vmem>>, vector<1x64x128xf32>,
    return
  }
  func.func @transform_0(%arg0: i32, %arg1: i32) -> (i32, i32, i32, i32) {
    %c0_i32 = arith.constant 0 : i32
    %c0_i32_0 = arith.constant 0 : i32
    %c0_i32_1 = arith.constant 0 : i32
    %c0_i32_2 = arith.constant 0 : i32
    return %arg0, %c0_i32, %c0_i32_0, %c0_i32_1 : i32, i32, i32, i32
  }
  func.func @transform_1(%arg0: i32, %arg1: i32) -> (i32, i32, i32) {
    %c0_i32 = arith.constant 0 : i32
    %c0_i32_0 = arith.constant 0 : i32
    %c0_i32_1 = arith.constant 0 : i32
    %c0_i32_2 = arith.constant 0 : i32
    return %c0_i32, %c0_i32_0, %c0_i32_1 : i32, i32, i32
  }
  func.func @transform_2(%arg0: i32, %arg1: i32) -> (i32, i32) {
    %c0_i32 = arith.constant 0 : i32
    %c0_i32_0 = arith.constant 0 : i32
    %c0_i32_1 = arith.constant 0 : i32
    return %c0_i32, %c0_i32_0 : i32, i32
  }
  func.func @transform_3(%arg0: i32, %arg1: i32) -> (i32, i32, i32) {
    %c0_i32 = arith.constant 0 : i32
    %c0_i32_0 = arith.constant 0 : i32
    return %arg0, %arg1, %c0_i32 : i32, i32, i32
  }
}

</mosaic_0001>

<llo_original>
// kernel: tpu_custom_call.1
$region0: #{tpu_custom_call.1}
  #allocation0 [shape = 'u32[]', space=smem, size = 0x4, offset = 0x4, fixed_abs, tag = 'smem constant byte address 0x4 - core index']
  #allocation1 [shape = 'u32[72,128]{1,0:T(1,128)}', space=vmem, size = 0x9000, scoped, tag = 'internal scratch']
  %s0 = inlined_call_operand.vmem [shape: f32[2,36,9,4], index: 0, kind: input, shape index: {}]
  %s1 = inlined_call_operand.vmem [shape: f32[9,4,128], index: 1, kind: input, shape index: {}]
  %s2 = inlined_call_operand.vmem [shape: f32[1,128], index: 2, kind: input, shape index: {}]
  %s3 = inlined_call_operand.hbm [shape: f32[2,64,128], index: 3, kind: output, shape index: {}]
  %s4 = sld [smem:[#allocation0]]
  $region45: #{tpu_custom_call.1} parent=0
    _
  %s6 = ssub.s32 1, %s4
  %s7 = scalar_select 0, %s6, %s4
  $region1: #{tpu_custom_call.1} parent=0
    #allocation2 [shape = 'u8[65536]{0}', space=vmem, size = 0x10000, scoped, tag = 'output window, operand 0']
    #allocation3 [shape = 's32[2]{0}', space=sflag, size = 0x8, scoped, tag = 'scoped memory for tpu_custom_call.1']
    %8 = vsyncpa [#allocation3], 0
    %s9 = scalar_lea.sflag [#allocation3], 1
    %10 = vsyncpa %s9, 0
    loop: start=0, step=1, limit=4
    $region2: #{tpu_custom_call.1} parent=1 // loop_pre_header
      _
    $region3: #{tpu_custom_call.1} parent=1 // loop_header
      %s12 = sphi 0, %s16
      %p13 = scmp.ge.s32.totalorder %s12, 4
      %s19 = sphi 0, %s31
      %s20 = sphi 0, %s27
      %s21 = sphi 0, %s19
      %s22 = sphi 0, %s20
      %s23 = sphi 0, %s21
      %s24 = sphi 0, %s22
      %s34 = sphi 0, %s36
      %s37 = sphi 0, %s34
      %s38 = sphi 0, %s37
      %s54 = sphi 0, %s38
      %s58 = sphi 0, %s58
      %s60 = sphi 0, %s58
      %s61 = sphi 0, %s60
      %s75 = sphi 0, %s61
      %s79 = sphi 0, %s79
      %s81 = sphi 0, %s79
      %s82 = sphi 0, %s81
      %s96 = sphi 0, %s82
      %s104 = sphi 0, %s106
      %s107 = sphi 0, %s104
      %s108 = sphi 0, %s107
      %s124 = sphi 0, %s108
    $region4: #{tpu_custom_call.1} parent=1 // loop_header_branch
      %15 = sbr.rel (%p13) target = $region8
    $region5: #{tpu_custom_call.1} parent=1 // loop_body
      %s17 = ssub.s32 %s12, 1
      %s18 = ssub.s32 %s12, 2
      %s25 = sadd.s32 1, %s20
      %p26 = scmp.ge.s32.totalorder %s25, 1
      %s27 = scalar_select %p26, 0, %s25
      %s28 = sadd.s32 1, %s19
      %s29 = scalar_select %p26, %s28, %s19
      %p30 = scmp.ge.s32.totalorder %s29, 2
      %s31 = scalar_select %p30, 0, %s29
      %s32 = ssub.s32 %s19, %s31
      %p33 = scmp.eq.s32.totalorder %s32, 0
      %s35 = sadd.s32 %s34, 1
      %s36 = scalar_select %p33, %s34, %s35
      %p39 = pneg %p33
      %p40 = scmp.eq.s32.totalorder %s12, 1
      %p41 = por %p39, %p40
      %p42 = scmp.ne.s32.totalorder %s34, %s37
      %p43 = scmp.eq.s32.totalorder %s12, 0
      %p44 = por %p42, %p43
      %p45 = scmp.ne.s32.totalorder %s34, %s37
      %p46 = scmp.eq.s32.totalorder %s17, 1
      %p47 = por %p45, %p46
      %p48 = scmp.ne.s32.totalorder %s37, %s38
      %p49 = scmp.eq.s32.totalorder %s17, 0
      %p50 = por %p48, %p49
      %p51 = scmp.ne.s32.totalorder %s37, %s38
      %p52 = scmp.eq.s32.totalorder %s18, 1
      %p53 = por %p51, %p52
      %p55 = scmp.ne.s32.totalorder %s38, %s54
      %p56 = scmp.eq.s32.totalorder %s18, 0
      %p57 = por %p55, %p56
      %s59 = sadd.s32 %s58, 1
      %p62 = scmp.eq.s32.totalorder %s12, 1
      %p63 = scmp.ne.s32.totalorder %s58, %s60
      %p64 = scmp.eq.s32.totalorder %s12, 0
      %p65 = por %p63, %p64
      %p66 = scmp.ne.s32.totalorder %s58, %s60
      %p67 = scmp.eq.s32.totalorder %s17, 1
      %p68 = por %p66, %p67
      %p69 = scmp.ne.s32.totalorder %s60, %s61
      %p70 = scmp.eq.s32.totalorder %s17, 0
      %p71 = por %p69, %p70
      %p72 = scmp.ne.s32.totalorder %s60, %s61
      %p73 = scmp.eq.s32.totalorder %s18, 1
      %p74 = por %p72, %p73
      %p76 = scmp.ne.s32.totalorder %s61, %s75
      %p77 = scmp.eq.s32.totalorder %s18, 0
      %p78 = por %p76, %p77
      %s80 = sadd.s32 %s79, 1
      %p83 = scmp.eq.s32.totalorder %s12, 1
      %p84 = scmp.ne.s32.totalorder %s79, %s81
      %p85 = scmp.eq.s32.totalorder %s12, 0
      %p86 = por %p84, %p85
      %p87 = scmp.ne.s32.totalorder %s79, %s81
      %p88 = scmp.eq.s32.totalorder %s17, 1
      %p89 = por %p87, %p88
      %p90 = scmp.ne.s32.totalorder %s81, %s82
      %p91 = scmp.eq.s32.totalorder %s17, 0
      %p92 = por %p90, %p91
      %p93 = scmp.ne.s32.totalorder %s81, %s82
      %p94 = scmp.eq.s32.totalorder %s18, 1
      %p95 = por %p93, %p94
      %p97 = scmp.ne.s32.totalorder %s82, %s96
      %p98 = scmp.eq.s32.totalorder %s18, 0
      %p99 = por %p97, %p98
      %s100 = ssub.s32 %s19, %s31
      %s101 = ssub.s32 %s20, %s27
      %s102 = sor.u32 %s100, %s101
      %p103 = scmp.eq.s32.totalorder %s102, 0
      %s105 = sadd.s32 %s104, 1
      %s106 = scalar_select %p103, %s104, %s105
      %p109 = pneg %p103
      %p110 = scmp.eq.s32.totalorder %s12, 1
      %p111 = por %p109, %p110
      %p112 = scmp.ne.s32.totalorder %s104, %s107
      %p113 = scmp.eq.s32.totalorder %s12, 0
      %p114 = por %p112, %p113
      %p115 = scmp.ne.s32.totalorder %s104, %s107
      %p116 = scmp.eq.s32.totalorder %s17, 1
      %p117 = por %p115, %p116
      %p118 = scmp.ne.s32.totalorder %s107, %s108
      %p119 = scmp.eq.s32.totalorder %s17, 0
      %p120 = por %p118, %p119
      %p121 = scmp.ne.s32.totalorder %s107, %s108
      %p122 = scmp.eq.s32.totalorder %s18, 1
      %p123 = por %p121, %p122
      %p125 = scmp.ne.s32.totalorder %s108, %s124
      %p126 = scmp.eq.s32.totalorder %s18, 0
      %p127 = por %p125, %p126
      %p128 = scmp.le.s32.totalorder 1, %s12
      %p129 = scmp.lt.s32.totalorder %s12, 3
      %p130 = pnand %p128, %p129
      %p131 = pneg %p130
      // Predicated region
      $region9: #{tpu_custom_call.1} parent=5 // pred_check
        _
      $region10: #{tpu_custom_call.1} parent=5 // pred_check_branch
        %133 = sbr.rel (%p130) target = $region12
      $region11: #{tpu_custom_call.1} parent=5 // pred_region
        %s134 = ssub.s32 %s12, 1
        // Predicated region
        $region13: #{tpu_custom_call.1} parent=11 // pred_check
          %p135 = pneg %p71
        $region14: #{tpu_custom_call.1} parent=11 // pred_check_branch
          %137 = sbr.rel (%p135) target = $region16
        $region15: #{tpu_custom_call.1} parent=11 // pred_region
          _
        $region16: #{tpu_custom_call.1} parent=11 // pred_fallthru
          _
        // Predicated region
        $region17: #{tpu_custom_call.1} parent=11 // pred_check
          %p138 = pneg %p92
        $region18: #{tpu_custom_call.1} parent=11 // pred_check_branch
          %140 = sbr.rel (%p138) target = $region20
        $region19: #{tpu_custom_call.1} parent=11 // pred_region
          _
        $region20: #{tpu_custom_call.1} parent=11 // pred_fallthru
          _
      $region12: #{tpu_custom_call.1} parent=5 // pred_fallthru
        _
      %p141 = scmp.lt.s32.totalorder %s12, 2
      // Predicated region
      $region21: #{tpu_custom_call.1} parent=5 // pred_check
        %p142 = pneg %p141
      $region22: #{tpu_custom_call.1} parent=5 // pred_check_branch
        %144 = sbr.rel (%p142) target = $region24
      $region23: #{tpu_custom_call.1} parent=5 // pred_region
        // Predicated region
        $region25: #{tpu_custom_call.1} parent=23 // pred_check
          %p145 = pneg %p44
        $region26: #{tpu_custom_call.1} parent=23 // pred_check_branch
          %147 = sbr.rel (%p145) target = $region28
        $region27: #{tpu_custom_call.1} parent=23 // pred_region
          %p148 = scmp.lt.s32.totalorder %s19, 1
          %s149 = scalar_select %p148, %s19, 1
          %s150 = smul.addr %s149, 72
          %s151 = smul.addr %s150, 8
          %s152 = scalar_lea.vmem %s0, %s151
        $region28: #{tpu_custom_call.1} parent=23 // pred_fallthru
          _
      $region24: #{tpu_custom_call.1} parent=5 // pred_fallthru
        _
      %p153 = scmp.le.s32.totalorder 1, %s12
      %p154 = scmp.lt.s32.totalorder %s12, 3
      %p155 = pnand %p153, %p154
      %p156 = pneg %p155
      // Predicated region
      $region29: #{tpu_custom_call.1} parent=5 // pred_check
        _
      $region30: #{tpu_custom_call.1} parent=5 // pred_check_branch
        %158 = sbr.rel (%p155) target = $region32
      $region31: #{tpu_custom_call.1} parent=5 // pred_region
        %s159 = ssub.s32 %s12, 1
        %p160 = scmp.lt.s32.totalorder %s21, 1
        %s161 = scalar_select %p160, %s21, 1
        %s162 = smul.addr %s161, 72
        %s163 = smul.addr %s162, 8
        %s164 = scalar_lea.vmem %s0, %s163
        %p165 = pneg %p50
        %p166 = pneg %p47
        %p167 = pneg %p71
        %p168 = pneg %p68
        %p169 = pneg %p92
        %p170 = pneg %p89
        %p171 = pneg %p120
        %p172 = pneg %p117
        %s173 = sand.u32 %s107, 1
        %s174 = scalar_lea.sflag [#allocation3], %s173
        %s175 = sand.u32 %s107, 1
        %s176 = smul.addr %s175, 64
        %s177 = scalar_lea.vmem [#allocation2], %s176
        %p178 = scmp.lt.s32.totalorder %s21, 1
        %s179 = scalar_select %p178, %s21, 1
        %s180 = smul.addr %s179, 72
        %s181 = smul.addr %s180, 8
        %s182 = scalar_lea.vmem %s0, %s181
        %s183 = smul.u32 8, %s22
        %s184 = smul.u32 %s22, 8
        %s185 = smul.u32 %s184, 16
        %s186 = scalar_lea.vmem %s182, %s185
        %v187 = vld [vmem:[%s186] sm:$0xff]
        %v188 = vld [vmem:[%s186 + $0x10] sm:$0xff]
        %v189 = vld [vmem:[%s186 + $0x20] sm:$0xff]
        %v190 = vld [vmem:[%s186 + $0x30] sm:$0xff]
        %v191 = vld [vmem:[%s186 + $0x40] sm:$0xff]
        %v192 = vld [vmem:[%s186 + $0x50] sm:$0xff]
        %v193 = vld [vmem:[%s186 + $0x60] sm:$0xff]
        %v194 = vld [vmem:[%s186 + $0x70] sm:$0xff]
        %v195 = vld [vmem:[%s1] sm:$0xf]
        %s196 = sadd.s32 %s184, 9
        %s197 = smul.u32 %s196, 16
        %s198 = scalar_lea.vmem %s182, %s197
        %v199 = vld [vmem:[%s198] sm:$0xff]
        %v200 = vld [vmem:[%s198 + $0x10] sm:$0xff]
        %v201 = vld [vmem:[%s198 + $0x20] sm:$0xff]
        %v202 = vld [vmem:[%s198 + $0x30] sm:$0xff]
        %v203 = vld [vmem:[%s198 + $0x40] sm:$0xff]
        %v204 = vld [vmem:[%s198 + $0x50] sm:$0xff]
        %v205 = vld [vmem:[%s198 + $0x60] sm:$0xff]
        %v206 = vld [vmem:[%s198 + $0x70] sm:$0xff]
        %s207 = scalar_lea.vmem %s1, 4
        %v208 = vld [vmem:[%s207] sm:$0xf]
        %vm209 = vcmask 31744
        %v211 = vsel %vm209, %v199, 0
        %v214 = vsel %vm209, %v200, 0
        %v217 = vsel %vm209, %v201, 0
        %v220 = vsel %vm209, %v202, 0
        %v223 = vsel %vm209, %v203, 0
        %v226 = vsel %vm209, %v204, 0
        %v229 = vsel %vm209, %v205, 0
        %v232 = vsel %vm209, %v206, 0
        %vm234 = vcmask 1043456
        %v236 = vsel %vm234, %v208, 0
        %238 = vmatpush.msra.mxu0 0.0
        %239 = vmatpush.msra.mxu0 0.0
        %240 = vmatpush.msra.mxu0 0.0
        %241 = vmatpush.msra.mxu0 0.0
        %242 = vmatpush.msra.mxu0 0.0
        %243 = vmatpush.msra.mxu0 0.0
        %244 = vmatpush.msra.mxu0 0.0
        %245 = vmatpush.msra.mxu0 0.0
        %246 = vmatpush.msra.mxu0 0.0
        %247 = vmatpush.msra.mxu0 0.0
        %248 = vmatpush.msra.mxu0 0.0
        %249 = vmatpush.msra.mxu0 0.0
        %250 = vmatpush.msra.mxu0 0.0
        %251 = vmatpush.msra.mxu0 0.0
        %252 = vmatpush.msra.mxu0 0.0
        %253 = vmatpush.msra.mxu0 %v236
        %254 = vmatmul.f32.gmra.mxu0 %v211
        %v255 = vpop.f32.mrf.mxu0
        %v256 = vadd.f32 0.0, %v255
        %257 = vmatmul.f32.gmra.mxu0 %v214
        %v258 = vpop.f32.mrf.mxu0
        %v259 = vadd.f32 0.0, %v258
        %260 = vmatmul.f32.gmra.mxu0 %v217
        %v261 = vpop.f32.mrf.mxu0
        %v262 = vadd.f32 0.0, %v261
        %263 = vmatmul.f32.gmra.mxu0 %v220
        %v264 = vpop.f32.mrf.mxu0
        %v265 = vadd.f32 0.0, %v264
        %266 = vmatmul.f32.gmra.mxu0 %v223
        %v267 = vpop.f32.mrf.mxu0
        %v268 = vadd.f32 0.0, %v267
        %269 = vmatmul.f32.gmra.mxu0 %v226
        %v270 = vpop.f32.mrf.mxu0
        %v271 = vadd.f32 0.0, %v270
        %272 = vmatmul.f32.gmra.mxu0 %v229
        %v273 = vpop.f32.mrf.mxu0
        %v274 = vadd.f32 0.0, %v273
        %275 = vmatmul.f32.gmra.mxu0 %v232
        %v276 = vpop.f32.mrf.mxu0
        %v277 = vadd.f32 0.0, %v276
        %278 = vdwg.mxu0
        %v280 = vsel %vm209, %v187, 0
        %v283 = vsel %vm209, %v188, 0
        %v286 = vsel %vm209, %v189, 0
        %v289 = vsel %vm209, %v190, 0
        %v292 = vsel %vm209, %v191, 0
        %v295 = vsel %vm209, %v192, 0
        %v298 = vsel %vm209, %v193, 0
        %v301 = vsel %vm209, %v194, 0
        %v304 = vsel %vm234, %v195, 0
        %306 = vmatpush.msra.mxu0 0.0
        %307 = vmatpush.msra.mxu0 0.0
        %308 = vmatpush.msra.mxu0 0.0
        %309 = vmatpush.msra.mxu0 0.0
        %310 = vmatpush.msra.mxu0 0.0
        %311 = vmatpush.msra.mxu0 0.0
        %312 = vmatpush.msra.mxu0 0.0
        %313 = vmatpush.msra.mxu0 0.0
        %314 = vmatpush.msra.mxu0 0.0
        %315 = vmatpush.msra.mxu0 0.0
        %316 = vmatpush.msra.mxu0 0.0
        %317 = vmatpush.msra.mxu0 0.0
        %318 = vmatpush.msra.mxu0 0.0
        %319 = vmatpush.msra.mxu0 0.0
        %320 = vmatpush.msra.mxu0 0.0
        %321 = vmatpush.msra.mxu0 %v304
        %322 = vmatmul.f32.gmra.mxu0 %v280
        %v323 = vpop.f32.mrf.mxu0
        %v324 = vadd.f32 %v256, %v323
        %325 = vmatmul.f32.gmra.mxu0 %v283
        %v326 = vpop.f32.mrf.mxu0
        %v327 = vadd.f32 %v259, %v326
        %328 = vmatmul.f32.gmra.mxu0 %v286
        %v329 = vpop.f32.mrf.mxu0
        %v330 = vadd.f32 %v262, %v329
        %331 = vmatmul.f32.gmra.mxu0 %v289
        %v332 = vpop.f32.mrf.mxu0
        %v333 = vadd.f32 %v265, %v332
        %334 = vmatmul.f32.gmra.mxu0 %v292
        %v335 = vpop.f32.mrf.mxu0
        %v336 = vadd.f32 %v268, %v335
        %337 = vmatmul.f32.gmra.mxu0 %v295
        %v338 = vpop.f32.mrf.mxu0
        %v339 = vadd.f32 %v271, %v338
        %340 = vmatmul.f32.gmra.mxu0 %v298
        %v341 = vpop.f32.mrf.mxu0
        %v342 = vadd.f32 %v274, %v341
        %343 = vmatmul.f32.gmra.mxu0 %v301
        %v344 = vpop.f32.mrf.mxu0
        %v345 = vadd.f32 %v277, %v344
        %346 = vdwg.mxu0
        %v347 = vld [vmem:[%s186 + $0x1] sm:$0xff]
        %v348 = vld [vmem:[%s186 + $0x11] sm:$0xff]
        %v349 = vld [vmem:[%s186 + $0x21] sm:$0xff]
        %v350 = vld [vmem:[%s186 + $0x31] sm:$0xff]
        %v351 = vld [vmem:[%s186 + $0x41] sm:$0xff]
        %v352 = vld [vmem:[%s186 + $0x51] sm:$0xff]
        %v353 = vld [vmem:[%s186 + $0x61] sm:$0xff]
        %v354 = vld [vmem:[%s186 + $0x71] sm:$0xff]
        %s355 = scalar_lea.vmem %s1, 8
        %v356 = vld [vmem:[%s355] sm:$0xf]
        %v358 = vsel %vm209, %v347, 0
        %v361 = vsel %vm209, %v348, 0
        %v364 = vsel %vm209, %v349, 0
        %v367 = vsel %vm209, %v350, 0
        %v370 = vsel %vm209, %v351, 0
        %v373 = vsel %vm209, %v352, 0
        %v376 = vsel %vm209, %v353, 0
        %v379 = vsel %vm209, %v354, 0
        %v382 = vsel %vm234, %v356, 0
        %384 = vmatpush.msra.mxu0 0.0
        %385 = vmatpush.msra.mxu0 0.0
        %386 = vmatpush.msra.mxu0 0.0
        %387 = vmatpush.msra.mxu0 0.0
        %388 = vmatpush.msra.mxu0 0.0
        %389 = vmatpush.msra.mxu0 0.0
        %390 = vmatpush.msra.mxu0 0.0
        %391 = vmatpush.msra.mxu0 0.0
        %392 = vmatpush.msra.mxu0 0.0
        %393 = vmatpush.msra.mxu0 0.0
        %394 = vmatpush.msra.mxu0 0.0
        %395 = vmatpush.msra.mxu0 0.0
        %396 = vmatpush.msra.mxu0 0.0
        %397 = vmatpush.msra.mxu0 0.0
        %398 = vmatpush.msra.mxu0 0.0
        %399 = vmatpush.msra.mxu0 %v382
        %400 = vmatmul.f32.gmra.mxu0 %v358
        %v401 = vpop.f32.mrf.mxu0
        %v402 = vadd.f32 0.0, %v401
        %403 = vmatmul.f32.gmra.mxu0 %v361
        %v404 = vpop.f32.mrf.mxu0
        %v405 = vadd.f32 0.0, %v404
        %406 = vmatmul.f32.gmra.mxu0 %v364
        %v407 = vpop.f32.mrf.mxu0
        %v408 = vadd.f32 0.0, %v407
        %409 = vmatmul.f32.gmra.mxu0 %v367
        %v410 = vpop.f32.mrf.mxu0
        %v411 = vadd.f32 0.0, %v410
        %412 = vmatmul.f32.gmra.mxu0 %v370
        %v413 = vpop.f32.mrf.mxu0
        %v414 = vadd.f32 0.0, %v413
        %415 = vmatmul.f32.gmra.mxu0 %v373
        %v416 = vpop.f32.mrf.mxu0
        %v417 = vadd.f32 0.0, %v416
        %418 = vmatmul.f32.gmra.mxu0 %v376
        %v419 = vpop.f32.mrf.mxu0
        %v420 = vadd.f32 0.0, %v419
        %421 = vmatmul.f32.gmra.mxu0 %v379
        %v422 = vpop.f32.mrf.mxu0
        %v423 = vadd.f32 0.0, %v422
        %424 = vdwg.mxu0
        %v425 = vadd.f32 %v324, %v402
        %v426 = vadd.f32 %v327, %v405
        %v427 = vadd.f32 %v330, %v408
        %v428 = vadd.f32 %v333, %v411
        %v429 = vadd.f32 %v336, %v414
        %v430 = vadd.f32 %v339, %v417
        %v431 = vadd.f32 %v342, %v420
        %v432 = vadd.f32 %v345, %v423
        %s433 = sadd.s32 %s184, 18
        %s434 = smul.u32 %s433, 16
        %s435 = scalar_lea.vmem %s182, %s434
        %v436 = vld [vmem:[%s435] sm:$0xff]
        %v437 = vld [vmem:[%s435 + $0x10] sm:$0xff]
        %v438 = vld [vmem:[%s435 + $0x20] sm:$0xff]
        %v439 = vld [vmem:[%s435 + $0x30] sm:$0xff]
        %v440 = vld [vmem:[%s435 + $0x40] sm:$0xff]
        %v441 = vld [vmem:[%s435 + $0x50] sm:$0xff]
        %v442 = vld [vmem:[%s435 + $0x60] sm:$0xff]
        %v443 = vld [vmem:[%s435 + $0x70] sm:$0xff]
        %s444 = scalar_lea.vmem %s1, 12
        %v445 = vld [vmem:[%s444] sm:$0xf]
        %v447 = vsel %vm209, %v436, 0
        %v450 = vsel %vm209, %v437, 0
        %v453 = vsel %vm209, %v438, 0
        %v456 = vsel %vm209, %v439, 0
        %v459 = vsel %vm209, %v440, 0
        %v462 = vsel %vm209, %v441, 0
        %v465 = vsel %vm209, %v442, 0
        %v468 = vsel %vm209, %v443, 0
        %v471 = vsel %vm234, %v445, 0
        %473 = vmatpush.msra.mxu0 0.0
        %474 = vmatpush.msra.mxu0 0.0
        %475 = vmatpush.msra.mxu0 0.0
        %476 = vmatpush.msra.mxu0 0.0
        %477 = vmatpush.msra.mxu0 0.0
        %478 = vmatpush.msra.mxu0 0.0
        %479 = vmatpush.msra.mxu0 0.0
        %480 = vmatpush.msra.mxu0 0.0
        %481 = vmatpush.msra.mxu0 0.0
        %482 = vmatpush.msra.mxu0 0.0
        %483 = vmatpush.msra.mxu0 0.0
        %484 = vmatpush.msra.mxu0 0.0
        %485 = vmatpush.msra.mxu0 0.0
        %486 = vmatpush.msra.mxu0 0.0
        %487 = vmatpush.msra.mxu0 0.0
        %488 = vmatpush.msra.mxu0 %v471
        %489 = vmatmul.f32.gmra.mxu0 %v447
        %v490 = vpop.f32.mrf.mxu0
        %v491 = vadd.f32 0.0, %v490
        %492 = vmatmul.f32.gmra.mxu0 %v450
        %v493 = vpop.f32.mrf.mxu0
        %v494 = vadd.f32 0.0, %v493
        %495 = vmatmul.f32.gmra.mxu0 %v453
        %v496 = vpop.f32.mrf.mxu0
        %v497 = vadd.f32 0.0, %v496
        %498 = vmatmul.f32.gmra.mxu0 %v456
        %v499 = vpop.f32.mrf.mxu0
        %v500 = vadd.f32 0.0, %v499
        %501 = vmatmul.f32.gmra.mxu0 %v459
        %v502 = vpop.f32.mrf.mxu0
        %v503 = vadd.f32 0.0, %v502
        %504 = vmatmul.f32.gmra.mxu0 %v462
        %v505 = vpop.f32.mrf.mxu0
        %v506 = vadd.f32 0.0, %v505
        %507 = vmatmul.f32.gmra.mxu0 %v465
        %v508 = vpop.f32.mrf.mxu0
        %v509 = vadd.f32 0.0, %v508
        %510 = vmatmul.f32.gmra.mxu0 %v468
        %v511 = vpop.f32.mrf.mxu0
        %v512 = vadd.f32 0.0, %v511
        %513 = vdwg.mxu0
        %v514 = vadd.f32 %v425, %v491
        %v515 = vadd.f32 %v426, %v494
        %v516 = vadd.f32 %v427, %v497
        %v517 = vadd.f32 %v428, %v500
        %v518 = vadd.f32 %v429, %v503
        %v519 = vadd.f32 %v430, %v506
        %v520 = vadd.f32 %v431, %v509
        %v521 = vadd.f32 %v432, %v512
        %s522 = sadd.s32 %s184, 27
        %s523 = smul.u32 %s522, 16
        %s524 = scalar_lea.vmem %s182, %s523
        %v525 = vld [vmem:[%s524] sm:$0xff]
        %v526 = vld [vmem:[%s524 + $0x10] sm:$0xff]
        %v527 = vld [vmem:[%s524 + $0x20] sm:$0xff]
        %v528 = vld [vmem:[%s524 + $0x30] sm:$0xff]
        %v529 = vld [vmem:[%s524 + $0x40] sm:$0xff]
        %v530 = vld [vmem:[%s524 + $0x50] sm:$0xff]
        %v531 = vld [vmem:[%s524 + $0x60] sm:$0xff]
        %v532 = vld [vmem:[%s524 + $0x70] sm:$0xff]
        %s533 = scalar_lea.vmem %s1, 16
        %v534 = vld [vmem:[%s533] sm:$0xf]
        %v536 = vsel %vm209, %v525, 0
        %v539 = vsel %vm209, %v526, 0
        %v542 = vsel %vm209, %v527, 0
        %v545 = vsel %vm209, %v528, 0
        %v548 = vsel %vm209, %v529, 0
        %v551 = vsel %vm209, %v530, 0
        %v554 = vsel %vm209, %v531, 0
        %v557 = vsel %vm209, %v532, 0
        %v560 = vsel %vm234, %v534, 0
        %562 = vmatpush.msra.mxu0 0.0
        %563 = vmatpush.msra.mxu0 0.0
        %564 = vmatpush.msra.mxu0 0.0
        %565 = vmatpush.msra.mxu0 0.0
        %566 = vmatpush.msra.mxu0 0.0
        %567 = vmatpush.msra.mxu0 0.0
        %568 = vmatpush.msra.mxu0 0.0
        %569 = vmatpush.msra.mxu0 0.0
        %570 = vmatpush.msra.mxu0 0.0
        %571 = vmatpush.msra.mxu0 0.0
        %572 = vmatpush.msra.mxu0 0.0
        %573 = vmatpush.msra.mxu0 0.0
        %574 = vmatpush.msra.mxu0 0.0
        %575 = vmatpush.msra.mxu0 0.0
        %576 = vmatpush.msra.mxu0 0.0
        %577 = vmatpush.msra.mxu0 %v560
        %578 = vmatmul.f32.gmra.mxu0 %v536
        %v579 = vpop.f32.mrf.mxu0
        %v580 = vadd.f32 0.0, %v579
        %581 = vmatmul.f32.gmra.mxu0 %v539
        %v582 = vpop.f32.mrf.mxu0
        %v583 = vadd.f32 0.0, %v582
        %584 = vmatmul.f32.gmra.mxu0 %v542
        %v585 = vpop.f32.mrf.mxu0
        %v586 = vadd.f32 0.0, %v585
        %587 = vmatmul.f32.gmra.mxu0 %v545
        %v588 = vpop.f32.mrf.mxu0
        %v589 = vadd.f32 0.0, %v588
        %590 = vmatmul.f32.gmra.mxu0 %v548
        %v591 = vpop.f32.mrf.mxu0
        %v592 = vadd.f32 0.0, %v591
        %593 = vmatmul.f32.gmra.mxu0 %v551
        %v594 = vpop.f32.mrf.mxu0
        %v595 = vadd.f32 0.0, %v594
        %596 = vmatmul.f32.gmra.mxu0 %v554
        %v597 = vpop.f32.mrf.mxu0
        %v598 = vadd.f32 0.0, %v597
        %599 = vmatmul.f32.gmra.mxu0 %v557
        %v600 = vpop.f32.mrf.mxu0
        %v601 = vadd.f32 0.0, %v600
        %602 = vdwg.mxu0
        %v603 = vadd.f32 %v514, %v580
        %v604 = vadd.f32 %v515, %v583
        %v605 = vadd.f32 %v516, %v586
        %v606 = vadd.f32 %v517, %v589
        %v607 = vadd.f32 %v518, %v592
        %v608 = vadd.f32 %v519, %v595
        %v609 = vadd.f32 %v520, %v598
        %v610 = vadd.f32 %v521, %v601
        %v611 = vld [vmem:[%s435 + $0x1] sm:$0xff]
        %v612 = vld [vmem:[%s435 + $0x11] sm:$0xff]
        %v613 = vld [vmem:[%s435 + $0x21] sm:$0xff]
        %v614 = vld [vmem:[%s435 + $0x31] sm:$0xff]
        %v615 = vld [vmem:[%s435 + $0x41] sm:$0xff]
        %v616 = vld [vmem:[%s435 + $0x51] sm:$0xff]
        %v617 = vld [vmem:[%s435 + $0x61] sm:$0xff]
        %v618 = vld [vmem:[%s435 + $0x71] sm:$0xff]
        %s619 = scalar_lea.vmem %s1, 20
        %v620 = vld [vmem:[%s619] sm:$0xf]
        %v622 = vsel %vm209, %v611, 0
        %v625 = vsel %vm209, %v612, 0
        %v628 = vsel %vm209, %v613, 0
        %v631 = vsel %vm209, %v614, 0
        %v634 = vsel %vm209, %v615, 0
        %v637 = vsel %vm209, %v616, 0
        %v640 = vsel %vm209, %v617, 0
        %v643 = vsel %vm209, %v618, 0
        %v646 = vsel %vm234, %v620, 0
        %648 = vmatpush.msra.mxu0 0.0
        %649 = vmatpush.msra.mxu0 0.0
        %650 = vmatpush.msra.mxu0 0.0
        %651 = vmatpush.msra.mxu0 0.0
        %652 = vmatpush.msra.mxu0 0.0
        %653 = vmatpush.msra.mxu0 0.0
        %654 = vmatpush.msra.mxu0 0.0
        %655 = vmatpush.msra.mxu0 0.0
        %656 = vmatpush.msra.mxu0 0.0
        %657 = vmatpush.msra.mxu0 0.0
        %658 = vmatpush.msra.mxu0 0.0
        %659 = vmatpush.msra.mxu0 0.0
        %660 = vmatpush.msra.mxu0 0.0
        %661 = vmatpush.msra.mxu0 0.0
        %662 = vmatpush.msra.mxu0 0.0
        %663 = vmatpush.msra.mxu0 %v646
        %664 = vmatmul.f32.gmra.mxu0 %v622
        %v665 = vpop.f32.mrf.mxu0
        %v666 = vadd.f32 0.0, %v665
        %667 = vmatmul.f32.gmra.mxu0 %v625
        %v668 = vpop.f32.mrf.mxu0
        %v669 = vadd.f32 0.0, %v668
        %670 = vmatmul.f32.gmra.mxu0 %v628
        %v671 = vpop.f32.mrf.mxu0
        %v672 = vadd.f32 0.0, %v671
        %673 = vmatmul.f32.gmra.mxu0 %v631
        %v674 = vpop.f32.mrf.mxu0
        %v675 = vadd.f32 0.0, %v674
        %676 = vmatmul.f32.gmra.mxu0 %v634
        %v677 = vpop.f32.mrf.mxu0
        %v678 = vadd.f32 0.0, %v677
        %679 = vmatmul.f32.gmra.mxu0 %v637
        %v680 = vpop.f32.mrf.mxu0
        %v681 = vadd.f32 0.0, %v680
        %682 = vmatmul.f32.gmra.mxu0 %v640
        %v683 = vpop.f32.mrf.mxu0
        %v684 = vadd.f32 0.0, %v683
        %685 = vmatmul.f32.gmra.mxu0 %v643
        %v686 = vpop.f32.mrf.mxu0
        %v687 = vadd.f32 0.0, %v686
        %688 = vdwg.mxu0
        %v689 = vadd.f32 %v603, %v666
        %v690 = vadd.f32 %v604, %v669
        %v691 = vadd.f32 %v605, %v672
        %v692 = vadd.f32 %v606, %v675
        %v693 = vadd.f32 %v607, %v678
        %v694 = vadd.f32 %v608, %v681
        %v695 = vadd.f32 %v609, %v684
        %v696 = vadd.f32 %v610, %v687
        %s697 = sadd.s32 %s184, 1
        %s698 = smul.u32 %s697, 16
        %s699 = scalar_lea.vmem %s182, %s698
        %v700 = vld [vmem:[%s699] sm:$0xff]
        %v701 = vld [vmem:[%s699 + $0x10] sm:$0xff]
        %v702 = vld [vmem:[%s699 + $0x20] sm:$0xff]
        %v703 = vld [vmem:[%s699 + $0x30] sm:$0xff]
        %v704 = vld [vmem:[%s699 + $0x40] sm:$0xff]
        %v705 = vld [vmem:[%s699 + $0x50] sm:$0xff]
        %v706 = vld [vmem:[%s699 + $0x60] sm:$0xff]
        %v707 = vld [vmem:[%s699 + $0x70] sm:$0xff]
        %s708 = scalar_lea.vmem %s1, 24
        %v709 = vld [vmem:[%s708] sm:$0xf]
        %v711 = vsel %vm209, %v700, 0
        %v714 = vsel %vm209, %v701, 0
        %v717 = vsel %vm209, %v702, 0
        %v720 = vsel %vm209, %v703, 0
        %v723 = vsel %vm209, %v704, 0
        %v726 = vsel %vm209, %v705, 0
        %v729 = vsel %vm209, %v706, 0
        %v732 = vsel %vm209, %v707, 0
        %v735 = vsel %vm234, %v709, 0
        %737 = vmatpush.msra.mxu0 0.0
        %738 = vmatpush.msra.mxu0 0.0
        %739 = vmatpush.msra.mxu0 0.0
        %740 = vmatpush.msra.mxu0 0.0
        %741 = vmatpush.msra.mxu0 0.0
        %742 = vmatpush.msra.mxu0 0.0
        %743 = vmatpush.msra.mxu0 0.0
        %744 = vmatpush.msra.mxu0 0.0
        %745 = vmatpush.msra.mxu0 0.0
        %746 = vmatpush.msra.mxu0 0.0
        %747 = vmatpush.msra.mxu0 0.0
        %748 = vmatpush.msra.mxu0 0.0
        %749 = vmatpush.msra.mxu0 0.0
        %750 = vmatpush.msra.mxu0 0.0
        %751 = vmatpush.msra.mxu0 0.0
        %752 = vmatpush.msra.mxu0 %v735
        %753 = vmatmul.f32.gmra.mxu0 %v711
        %v754 = vpop.f32.mrf.mxu0
        %v755 = vadd.f32 0.0, %v754
        %756 = vmatmul.f32.gmra.mxu0 %v714
        %v757 = vpop.f32.mrf.mxu0
        %v758 = vadd.f32 0.0, %v757
        %759 = vmatmul.f32.gmra.mxu0 %v717
        %v760 = vpop.f32.mrf.mxu0
        %v761 = vadd.f32 0.0, %v760
        %762 = vmatmul.f32.gmra.mxu0 %v720
        %v763 = vpop.f32.mrf.mxu0
        %v764 = vadd.f32 0.0, %v763
        %765 = vmatmul.f32.gmra.mxu0 %v723
        %v766 = vpop.f32.mrf.mxu0
        %v767 = vadd.f32 0.0, %v766
        %768 = vmatmul.f32.gmra.mxu0 %v726
        %v769 = vpop.f32.mrf.mxu0
        %v770 = vadd.f32 0.0, %v769
        %771 = vmatmul.f32.gmra.mxu0 %v729
        %v772 = vpop.f32.mrf.mxu0
        %v773 = vadd.f32 0.0, %v772
        %774 = vmatmul.f32.gmra.mxu0 %v732
        %v775 = vpop.f32.mrf.mxu0
        %v776 = vadd.f32 0.0, %v775
        %777 = vdwg.mxu0
        %v778 = vadd.f32 %v689, %v755
        %v779 = vadd.f32 %v690, %v758
        %v780 = vadd.f32 %v691, %v761
        %v781 = vadd.f32 %v692, %v764
        %v782 = vadd.f32 %v693, %v767
        %v783 = vadd.f32 %v694, %v770
        %v784 = vadd.f32 %v695, %v773
        %v785 = vadd.f32 %v696, %v776
        %s786 = sadd.s32 %s184, 10
        %s787 = smul.u32 %s786, 16
        %s788 = scalar_lea.vmem %s182, %s787
        %v789 = vld [vmem:[%s788] sm:$0xff]
        %v790 = vld [vmem:[%s788 + $0x10] sm:$0xff]
        %v791 = vld [vmem:[%s788 + $0x20] sm:$0xff]
        %v792 = vld [vmem:[%s788 + $0x30] sm:$0xff]
        %v793 = vld [vmem:[%s788 + $0x40] sm:$0xff]
        %v794 = vld [vmem:[%s788 + $0x50] sm:$0xff]
        %v795 = vld [vmem:[%s788 + $0x60] sm:$0xff]
        %v796 = vld [vmem:[%s788 + $0x70] sm:$0xff]
        %s797 = scalar_lea.vmem %s1, 28
        %v798 = vld [vmem:[%s797] sm:$0xf]
        %v800 = vsel %vm209, %v789, 0
        %v803 = vsel %vm209, %v790, 0
        %v806 = vsel %vm209, %v791, 0
        %v809 = vsel %vm209, %v792, 0
        %v812 = vsel %vm209, %v793, 0
        %v815 = vsel %vm209, %v794, 0
        %v818 = vsel %vm209, %v795, 0
        %v821 = vsel %vm209, %v796, 0
        %v824 = vsel %vm234, %v798, 0
        %826 = vmatpush.msra.mxu0 0.0
        %827 = vmatpush.msra.mxu0 0.0
        %828 = vmatpush.msra.mxu0 0.0
        %829 = vmatpush.msra.mxu0 0.0
        %830 = vmatpush.msra.mxu0 0.0
        %831 = vmatpush.msra.mxu0 0.0
        %832 = vmatpush.msra.mxu0 0.0
        %833 = vmatpush.msra.mxu0 0.0
        %834 = vmatpush.msra.mxu0 0.0
        %835 = vmatpush.msra.mxu0 0.0
        %836 = vmatpush.msra.mxu0 0.0
        %837 = vmatpush.msra.mxu0 0.0
        %838 = vmatpush.msra.mxu0 0.0
        %839 = vmatpush.msra.mxu0 0.0
        %840 = vmatpush.msra.mxu0 0.0
        %841 = vmatpush.msra.mxu0 %v824
        %842 = vmatmul.f32.gmra.mxu0 %v800
        %v843 = vpop.f32.mrf.mxu0
        %v844 = vadd.f32 0.0, %v843
        %845 = vmatmul.f32.gmra.mxu0 %v803
        %v846 = vpop.f32.mrf.mxu0
        %v847 = vadd.f32 0.0, %v846
        %848 = vmatmul.f32.gmra.mxu0 %v806
        %v849 = vpop.f32.mrf.mxu0
        %v850 = vadd.f32 0.0, %v849
        %851 = vmatmul.f32.gmra.mxu0 %v809
        %v852 = vpop.f32.mrf.mxu0
        %v853 = vadd.f32 0.0, %v852
        %854 = vmatmul.f32.gmra.mxu0 %v812
        %v855 = vpop.f32.mrf.mxu0
        %v856 = vadd.f32 0.0, %v855
        %857 = vmatmul.f32.gmra.mxu0 %v815
        %v858 = vpop.f32.mrf.mxu0
        %v859 = vadd.f32 0.0, %v858
        %860 = vmatmul.f32.gmra.mxu0 %v818
        %v861 = vpop.f32.mrf.mxu0
        %v862 = vadd.f32 0.0, %v861
        %863 = vmatmul.f32.gmra.mxu0 %v821
        %v864 = vpop.f32.mrf.mxu0
        %v865 = vadd.f32 0.0, %v864
        %866 = vdwg.mxu0
        %v867 = vadd.f32 %v778, %v844
        %v868 = vadd.f32 %v779, %v847
        %v869 = vadd.f32 %v780, %v850
        %v870 = vadd.f32 %v781, %v853
        %v871 = vadd.f32 %v782, %v856
        %v872 = vadd.f32 %v783, %v859
        %v873 = vadd.f32 %v784, %v862
        %v874 = vadd.f32 %v785, %v865
        %v875 = vld [vmem:[%s699 + $0x1] sm:$0xff]
        %v876 = vld [vmem:[%s699 + $0x11] sm:$0xff]
        %v877 = vld [vmem:[%s699 + $0x21] sm:$0xff]
        %v878 = vld [vmem:[%s699 + $0x31] sm:$0xff]
        %v879 = vld [vmem:[%s699 + $0x41] sm:$0xff]
        %v880 = vld [vmem:[%s699 + $0x51] sm:$0xff]
        %v881 = vld [vmem:[%s699 + $0x61] sm:$0xff]
        %v882 = vld [vmem:[%s699 + $0x71] sm:$0xff]
        %s883 = scalar_lea.vmem %s1, 32
        %v884 = vld [vmem:[%s883] sm:$0xf]
        %v886 = vsel %vm209, %v875, 0
        %v889 = vsel %vm209, %v876, 0
        %v892 = vsel %vm209, %v877, 0
        %v895 = vsel %vm209, %v878, 0
        %v898 = vsel %vm209, %v879, 0
        %v901 = vsel %vm209, %v880, 0
        %v904 = vsel %vm209, %v881, 0
        %v907 = vsel %vm209, %v882, 0
        %v910 = vsel %vm234, %v884, 0
        %912 = vmatpush.msra.mxu0 0.0
        %913 = vmatpush.msra.mxu0 0.0
        %914 = vmatpush.msra.mxu0 0.0
        %915 = vmatpush.msra.mxu0 0.0
        %916 = vmatpush.msra.mxu0 0.0
        %917 = vmatpush.msra.mxu0 0.0
        %918 = vmatpush.msra.mxu0 0.0
        %919 = vmatpush.msra.mxu0 0.0
        %920 = vmatpush.msra.mxu0 0.0
        %921 = vmatpush.msra.mxu0 0.0
        %922 = vmatpush.msra.mxu0 0.0
        %923 = vmatpush.msra.mxu0 0.0
        %924 = vmatpush.msra.mxu0 0.0
        %925 = vmatpush.msra.mxu0 0.0
        %926 = vmatpush.msra.mxu0 0.0
        %927 = vmatpush.msra.mxu0 %v910
        %928 = vmatmul.f32.gmra.mxu0 %v886
        %v929 = vpop.f32.mrf.mxu0
        %v930 = vadd.f32 0.0, %v929
        %931 = vmatmul.f32.gmra.mxu0 %v889
        %v932 = vpop.f32.mrf.mxu0
        %v933 = vadd.f32 0.0, %v932
        %934 = vmatmul.f32.gmra.mxu0 %v892
        %v935 = vpop.f32.mrf.mxu0
        %v936 = vadd.f32 0.0, %v935
        %937 = vmatmul.f32.gmra.mxu0 %v895
        %v938 = vpop.f32.mrf.mxu0
        %v939 = vadd.f32 0.0, %v938
        %940 = vmatmul.f32.gmra.mxu0 %v898
        %v941 = vpop.f32.mrf.mxu0
        %v942 = vadd.f32 0.0, %v941
        %943 = vmatmul.f32.gmra.mxu0 %v901
        %v944 = vpop.f32.mrf.mxu0
        %v945 = vadd.f32 0.0, %v944
        %946 = vmatmul.f32.gmra.mxu0 %v904
        %v947 = vpop.f32.mrf.mxu0
        %v948 = vadd.f32 0.0, %v947
        %949 = vmatmul.f32.gmra.mxu0 %v907
        %v950 = vpop.f32.mrf.mxu0
        %v951 = vadd.f32 0.0, %v950
        %952 = vdwg.mxu0
        %v953 = vadd.f32 %v867, %v930
        %v954 = vadd.f32 %v868, %v933
        %v955 = vadd.f32 %v869, %v936
        %v956 = vadd.f32 %v870, %v939
        %v957 = vadd.f32 %v871, %v942
        %v958 = vadd.f32 %v872, %v945
        %v959 = vadd.f32 %v873, %v948
        %v960 = vadd.f32 %v874, %v951
        %v961 = vld [vmem:[%s2] sm:$0x1]
        %v963 = vperm.slane %v961, 0
        %v965 = vadd.f32 %v953, %v963
        %v966 = vadd.f32 %v954, %v963
        %v967 = vadd.f32 %v955, %v963
        %v968 = vadd.f32 %v956, %v963
        %v969 = vadd.f32 %v957, %v963
        %v970 = vadd.f32 %v958, %v963
        %v971 = vadd.f32 %v959, %v963
        %v972 = vadd.f32 %v960, %v963
        %v973 = vmax.f32 %v965, 0.0
        %v974 = vmax.f32 %v966, 0.0
        %v975 = vmax.f32 %v967, 0.0
        %v976 = vmax.f32 %v968, 0.0
        %v977 = vmax.f32 %v969, 0.0
        %v978 = vmax.f32 %v970, 0.0
        %v979 = vmax.f32 %v971, 0.0
        %v980 = vmax.f32 %v972, 0.0
        %981 = vst [vmem:[%s177] sm:$0xff] %v973
        %982 = vst [vmem:[%s177 + $0x8] sm:$0xff] %v974
        %983 = vst [vmem:[%s177 + $0x10] sm:$0xff] %v975
        %984 = vst [vmem:[%s177 + $0x18] sm:$0xff] %v976
        %985 = vst [vmem:[%s177 + $0x20] sm:$0xff] %v977
        %986 = vst [vmem:[%s177 + $0x28] sm:$0xff] %v978
        %987 = vst [vmem:[%s177 + $0x30] sm:$0xff] %v979
        %988 = vst [vmem:[%s177 + $0x38] sm:$0xff] %v980
        %s989 = sand.u32 %s107, 1
        %s990 = scalar_lea.sflag [#allocation3], %s989
        %s991 = sand.u32 %s107, 1
        %s992 = smul.addr %s991, 64
        %s993 = scalar_lea.vmem [#allocation2], %s992
        // Predicated region
        $region33: #{tpu_custom_call.1} parent=31 // pred_check
          %p994 = pneg %p117
        $region34: #{tpu_custom_call.1} parent=31 // pred_check_branch
          %996 = sbr.rel (%p994) target = $region36
        $region35: #{tpu_custom_call.1} parent=31 // pred_region
          %s997 = smul.u32 8, %s22
          %999 = vsyncadd %s990, 0
          %s1000 = smul.addr %s21, 8
          %s1001 = sadd.s32 %s997, %s1000
          %s1002 = smul.addr %s1001, 8
          %s1003 = scalar_lea.hbm %s3, %s1002
          %s1004 = sshll.u32 %s993, 4
          %s1005 = int_to_ptr.vmem [resolvable:$true] %s1004
          %s1006 = sshll.u32 %s1003, 4
          %s1007 = int_to_ptr.hbm [resolvable:$true] %s1006
          %1012 = dma.vmem_to_hbm [thread:$0]  %s1005, 1024, %s1007, %s990, 128, 128, 8
        $region36: #{tpu_custom_call.1} parent=31 // pred_fallthru
          _
      $region32: #{tpu_custom_call.1} parent=5 // pred_fallthru
        _
      %p1013 = scmp.le.s32.totalorder 2, %s12
      // Predicated region
      $region37: #{tpu_custom_call.1} parent=5 // pred_check
        %p1014 = pneg %p1013
      $region38: #{tpu_custom_call.1} parent=5 // pred_check_branch
        %1016 = sbr.rel (%p1014) target = $region40
      $region39: #{tpu_custom_call.1} parent=5 // pred_region
        %s1017 = ssub.s32 %s12, 2
        // Predicated region
        $region41: #{tpu_custom_call.1} parent=39 // pred_check
          %p1018 = pneg %p123
        $region42: #{tpu_custom_call.1} parent=39 // pred_check_branch
          %1020 = sbr.rel (%p1018) target = $region44
        $region43: #{tpu_custom_call.1} parent=39 // pred_region
          %s1021 = sand.u32 %s108, 1
          %s1022 = scalar_lea.sflag [#allocation3], %s1021
          %s1023 = sand.u32 %s108, 1
          %s1024 = smul.addr %s1023, 64
          %s1025 = scalar_lea.vmem [#allocation2], %s1024
          %1027 = dma.done %s1022, 1024
        $region44: #{tpu_custom_call.1} parent=39 // pred_fallthru
          _
      $region40: #{tpu_custom_call.1} parent=5 // pred_fallthru
        _
    $region6: #{tpu_custom_call.1} parent=1 // loop_footer
      %s16 = sadd.s32 1, %s12
    $region7: #{tpu_custom_call.1} parent=1 // loop_footer_branch
      %11 = sbr.rel target = $region3
    $region8: #{tpu_custom_call.1} parent=1 // loop_exit
      _
    %1028 = vsyncpa [#allocation3], 1
    %s1029 = scalar_lea.sflag [#allocation3], 1
    %1030 = vsyncpa %s1029, 1

</llo_original>
